<compile_context>
chip_gen: v7x
topology: tpu7x:2x2x1
jax: 0.10.0
libtpu: 0.0.40
codegen_flags: <defaults>
</compile_context>

<pallas_src>
import jax
import jax.numpy as jnp
from jax.experimental import pallas as pl
from jax.experimental.pallas import tpu as pltpu


def _round_up(x, m):
    return ((x + m - 1) // m) * m


# --------------------------------------------------------------------------- kernels
def ffn_kernel_acc(x_ref, w1_ref, b1_ref, w2_ref, b2_ref, o_ref, acc_ref):
    """K-blocked variant: grid = (rows, cols, k) with an f32 accumulator scratch."""
    k = pl.program_id(2)

    @pl.when(k == 0)
    def _init():
        # Fold the second bias into the accumulator init (epilogue fusion).
        acc_ref[...] = jnp.broadcast_to(
            b2_ref[...].astype(jnp.float32), acc_ref.shape)

    # First matmul chunk: (tm, outer_p) @ (outer_p, tk) -> (tm, tk)
    h = jnp.dot(x_ref[...], w1_ref[...], preferred_element_type=jnp.float32)
    h = jnp.maximum(h + b1_ref[...].astype(jnp.float32), 0.0)  # bias + ReLU (per-chunk, exact)
    # Dropout == identity (eval mode).
    # Second matmul chunk; clean dot-then-accumulate (MRB-friendly on v7x).
    acc_ref[...] += jnp.dot(h.astype(w2_ref.dtype), w2_ref[...],
                            preferred_element_type=jnp.float32)

    @pl.when(k == pl.num_programs(2) - 1)
    def _finalize():
        o_ref[...] = acc_ref[...].astype(o_ref.dtype)


def ffn_kernel_single(x_ref, w1_ref, b1_ref, w2_ref, b2_ref, o_ref):
    """Single-K-chunk variant: no accumulator scratch, direct output write."""
    h = jnp.dot(x_ref[...], w1_ref[...], preferred_element_type=jnp.float32)
    h = jnp.maximum(h + b1_ref[...].astype(jnp.float32), 0.0)
    out = jnp.dot(h.astype(w2_ref.dtype), w2_ref[...],
                  preferred_element_type=jnp.float32)
    o_ref[...] = (out + b2_ref[...].astype(jnp.float32)).astype(o_ref.dtype)


# ----------------------------------------------------------------- hardware awareness
def _vmem_ceiling_bytes():
    cap = 64 * 1024 * 1024  # conservative default = v7x per-TensorCore VMEM
    try:
        info = pltpu.get_tpu_info()
        cap = int(getattr(info, "vmem_capacity_bytes", cap)) or cap
    except Exception:
        pass
    # Leave headroom below physical for Mosaic internal scratch / semaphores:
    # ~51 MiB on v7x (64 MiB phys), ~100 MiB on v5e/v6e (128 MiB phys).
    return min(int(cap * 4 // 5), 100 * 1024 * 1024)


def _num_tensorcores():
    try:
        info = pltpu.get_tpu_info()
        for name in ("num_cores", "core_count", "num_tensorcores", "tensorcore_count"):
            v = getattr(info, name, None)
            if v:
                return int(v)
    except Exception:
        pass
    return 1  # conservative: never shrink tiles on single-TC parts


# -------------------------------------------------------------------- tile selection
def _vmem_bytes(tm, tn, tk, outer_p, x_isz, w_isz, o_isz, n_k):
    est = (
        2 * tm * outer_p * x_isz      # x tile, double-buffered (resident across j, k)
        + 2 * outer_p * tk * w_isz    # w1 chunk, double-buffered
        + 2 * 8 * tk * w_isz          # b1 chunk (sublane-padded)
        + 2 * tk * tn * w_isz         # w2 chunk, double-buffered
        + 2 * 8 * tn * w_isz          # b2 chunk
        + 2 * tm * tn * o_isz         # output tile, double-buffered
        + tm * tk * 4                 # h (f32 hidden-activation temporary)
        + tm * tk * w_isz             # h cast to w2 dtype
        + tm * tn * 4                 # second-matmul result temp
    )
    if n_k > 1:
        est += tm * tn * 4            # f32 accumulator scratch
    return est


def _aligned_divisors(dim, caps):
    """Multiples of 128 that divide `dim` (dim is itself a multiple of 128)."""
    out = []
    for cap in caps:
        t = max(128, (min(cap, dim) // 128) * 128)
        while dim % t:
            t -= 128
        if t not in out:
            out.append(t)
    return sorted(out, reverse=True)


def _pick_tiles(N, outer_p, inner_p, x_isz, w_isz, o_isz, budget):
    n_pad = max(128, _round_up(N, 128))
    tm_cands = [t for t in (1024, 512, 256, 128) if t <= n_pad] or [128]
    tn_cands = _aligned_divisors(outer_p, (outer_p, 2048, 1024, 512, 256, 128))
    tk_cands = _aligned_divisors(inner_p, (inner_p, 2048, 1024, 512, 256, 128))

    best = None
    for tm in tm_cands:
        for tn in tn_cands:
            for tk in tk_cands:
                n_k = inner_p // tk
                if _vmem_bytes(tm, tn, tk, outer_p, x_isz, w_isz, o_isz, n_k) > budget:
                    continue
                n_row = -(-N // tm)
                n_col = outer_p // tn
                # HBM weight traffic: w1 re-streamed per (row, col) tile, w2 per row
                # tile.  Minimize traffic, then prefer fewer grid steps / bigger tiles.
                traffic = (n_row * n_col + n_row) * outer_p * inner_p * w_isz
                key = (traffic, n_row * n_col * n_k, -tk, -tn, -tm)
                if best is None or key < best[0]:
                    best = (key, (tm, tn, tk))
    if best is None:
        # Nothing fits the budget estimate; fall back to minimal tiles.
        return 128, tn_cands[-1], tk_cands[-1]
    return best[1]


# ------------------------------------------------------------------------ public API
def pad_ffn_params(w1, b1, w2, b2):
    """One-time (init-time) padding of FFN params to lane-aligned (128) shapes.

    w1: [outer_dim, inner_dim], b1: [inner_dim] (or [1, inner_dim]),
    w2: [inner_dim, outer_dim], b2: [outer_dim] (or [1, outer_dim]).
    Weights are stored [in_features, out_features] (transposed vs nn.Linear.weight).
    Call once at init; do NOT call per forward pass.
    """
    outer_dim, inner_dim = w1.shape
    outer_p = _round_up(outer_dim, 128)
    inner_p = _round_up(inner_dim, 128)
    b1 = jnp.asarray(b1).reshape(1, -1)
    b2 = jnp.asarray(b2).reshape(1, -1)
    if (outer_p, inner_p) == (outer_dim, inner_dim):
        return w1, b1, w2, b2
    w1p = jnp.zeros((outer_p, inner_p), w1.dtype).at[:outer_dim, :inner_dim].set(w1)
    b1p = jnp.zeros((1, inner_p), b1.dtype).at[:, :inner_dim].set(b1)
    w2p = jnp.zeros((inner_p, outer_p), w2.dtype).at[:inner_dim, :outer_dim].set(w2)
    b2p = jnp.zeros((1, outer_p), b2.dtype).at[:, :outer_dim].set(b2)
    return w1p, b1p, w2p, b2p


def ffn_forward(x2d, w1p, b1p, w2p, b2p):
    """Fused FFN forward: relu(x @ w1 + b1) @ w2 + b2 (dropout = identity, eval mode).

    x2d: [N, outer_dim] (unpadded).  w1p/b1p/w2p/b2p: 128-aligned params produced by
    pad_ffn_params at init time.
    """
    N, outer_dim = x2d.shape
    outer_p, inner_p = w1p.shape
    dtype = x2d.dtype
    x_isz = jnp.dtype(dtype).itemsize
    w_isz = jnp.dtype(w1p.dtype).itemsize
    o_isz = x_isz

    vmem_limit = _vmem_ceiling_bytes()
    tm, tn, tk = _pick_tiles(N, outer_p, inner_p, x_isz, w_isz, o_isz,
                             budget=int(vmem_limit * 0.9))

    n_row_tiles = -(-N // tm)
    n_col_tiles = outer_p // tn
    n_k_tiles = inner_p // tk

    # Megacore (v7x): make sure the parallel axes have >= 2 iterations so both
    # TensorCores get work.  Single-TC parts keep the bigger tile (less weight
    # re-streaming).
    if (_num_tensorcores() >= 2 and n_row_tiles * n_col_tiles == 1
            and tm >= 256 and N > tm // 2):
        tm //= 2
        n_row_tiles = -(-N // tm)

    n_p = n_row_tiles * tm

    # Pad x only when needed (params were padded once at init; aligned shapes are a
    # zero-copy fast path).
    if (n_p, outer_p) == (N, outer_dim):
        xp = x2d
    else:
        xp = jnp.zeros((n_p, outer_p), dtype).at[:N, :outer_dim].set(x2d)

    cost = pl.CostEstimate(
        flops=4 * n_p * outer_p * inner_p,          # two matmuls
        transcendentals=0,
        bytes_accessed=int(
            xp.size * x_isz + n_p * outer_p * o_isz
            + (n_row_tiles * n_col_tiles + n_row_tiles) * outer_p * inner_p * w_isz
            + n_row_tiles * n_col_tiles * (inner_p + outer_p) * w_isz),
    )

    kernel = ffn_kernel_single if n_k_tiles == 1 else ffn_kernel_acc
    scratch = [] if n_k_tiles == 1 else [pltpu.VMEM((tm, tn), jnp.float32)]

    out_p = pl.pallas_call(
        kernel,
        out_shape=jax.ShapeDtypeStruct((n_p, outer_p), dtype),
        grid_spec=pltpu.PrefetchScalarGridSpec(
            num_scalar_prefetch=0,
            grid=(n_row_tiles, n_col_tiles, n_k_tiles),
            in_specs=[
                pl.BlockSpec((tm, outer_p), lambda i, j, k: (i, 0)),  # x (held over j, k)
                pl.BlockSpec((outer_p, tk), lambda i, j, k: (0, k)),  # w1 chunk
                pl.BlockSpec((1, tk),       lambda i, j, k: (0, k)),  # b1 chunk
                pl.BlockSpec((tk, tn),      lambda i, j, k: (k, j)),  # w2 chunk
                pl.BlockSpec((1, tn),       lambda i, j, k: (0, j)),  # b2 chunk
            ],
            out_specs=pl.BlockSpec((tm, tn), lambda i, j, k: (i, j)),
            scratch_shapes=scratch,
        ),
        compiler_params=pltpu.CompilerParams(
            dimension_semantics=("parallel", "parallel", "arbitrary"),
            vmem_limit_bytes=int(vmem_limit),
        ),
        cost_estimate=cost,
    )(xp, w1p, b1p, w2p, b2p)

    if (n_p, outer_p) == (N, outer_dim):
        return out_p
    return out_p[:N, :outer_dim]


if __name__ == "__main__":
    # Small shapes: batch=2, seq=8 -> N=16 rows; outer_dim=32, inner_dim=64.
    batch, seq = 2, 8
    outer_dim, inner_dim = 32, 64
    dropout_p = 0.1  # nn.Dropout is identity at inference (eval) time.

    key = jax.random.PRNGKey(0)
    kx, kw1, kb1, kw2, kb2 = jax.random.split(key, 5)

    # PyTorch-style uniform(-1/sqrt(fan_in), 1/sqrt(fan_in)) init.
    bound1 = 1.0 / (outer_dim ** 0.5)
    bound2 = 1.0 / (inner_dim ** 0.5)
    w1 = jax.random.uniform(kw1, (outer_dim, inner_dim), jnp.float32, -bound1, bound1)
    b1 = jax.random.uniform(kb1, (inner_dim,), jnp.float32, -bound1, bound1)
    w2 = jax.random.uniform(kw2, (inner_dim, outer_dim), jnp.float32, -bound2, bound2)
    b2 = jax.random.uniform(kb2, (outer_dim,), jnp.float32, -bound2, bound2)

    x = jax.random.normal(kx, (batch, seq, outer_dim), jnp.float32)

    # One-time parameter padding (init-time, outside the per-call path).
    w1p, b1p, w2p, b2p = pad_ffn_params(w1, b1, w2, b2)

    # Flatten leading dims, run fused kernel, restore shape.
    x2d = x.reshape(batch * seq, outer_dim)
    run = jax.jit(ffn_forward)
    out2d = run(x2d, w1p, b1p, w2p, b2p)
    out = out2d.reshape(batch, seq, outer_dim)
    jax.block_until_ready(out)

    # Reference check in plain JAX (PyTorch module semantics, eval mode).
    ref = jnp.maximum(x2d @ w1 + b1, 0.0) @ w2 + b2
    assert jnp.allclose(out2d, ref, atol=1e-5, rtol=1e-5), "mismatch vs reference"

    print("KERNEL_OK")
</pallas_src>

<mosaic_0001>
module attributes {stable_mosaic.version = 11 : i64} {
  func.func @ffn_kernel_single(%arg0: i32, %arg1: i32, %arg2: i32, %arg3: memref<128x128xf32, #tpu.memory_space<vmem>>, %arg4: memref<128x128xf32, #tpu.memory_space<vmem>>, %arg5: memref<1x128xf32, #tpu.memory_space<vmem>>, %arg6: memref<128x128xf32, #tpu.memory_space<vmem>>, %arg7: memref<1x128xf32, #tpu.memory_space<vmem>>, %arg8: memref<128x128xf32, #tpu.memory_space<vmem>>) attributes {dimension_semantics = [#tpu.dimension_semantics<parallel>, #tpu.dimension_semantics<parallel>, #tpu.dimension_semantics<arbitrary>], iteration_bounds = array<i64: 1, 1, 1>, scalar_prefetch = 0 : i64, scratch_operands = 0 : i64, tpu.core_type = #tpu.core_type<tc>, window_params = [{transform_indices = @transform_0, window_bounds = array<i64: 128, 128>}, {transform_indices = @transform_1, window_bounds = array<i64: 128, 128>}, {transform_indices = @transform_2, window_bounds = array<i64: 1, 128>}, {transform_indices = @transform_3, window_bounds = array<i64: 128, 128>}, {transform_indices = @transform_4, window_bounds = array<i64: 1, 128>}, {transform_indices = @transform_5, window_bounds = array<i64: 128, 128>}]} {
    %c0 = arith.constant 0 : index
    %c0_0 = arith.constant 0 : index
    %0 = vector.load %arg3[%c0, %c0_0] : memref<128x128xf32, #tpu.memory_space<vmem>>, vector<128x128xf32>
    %c0_1 = arith.constant 0 : index
    %c0_2 = arith.constant 0 : index
    %1 = vector.load %arg4[%c0_1, %c0_2] : memref<128x128xf32, #tpu.memory_space<vmem>>, vector<128x128xf32>
    %cst = arith.constant dense<0.000000e+00> : vector<128x128xf32>
    %2 = tpu.matmul %0, %1, %cst {dimension_numbers = #tpu.dot_dimension_numbers<[1], [0], [0], [1], [0, 0, 1, 1], [], []>} : vector<128x128xf32>, vector<128x128xf32>, vector<128x128xf32> -> vector<128x128xf32>
    %c0_3 = arith.constant 0 : index
    %c0_4 = arith.constant 0 : index
    %3 = vector.load %arg5[%c0_3, %c0_4] : memref<1x128xf32, #tpu.memory_space<vmem>>, vector<1x128xf32>
    %4 = vector.broadcast %3 : vector<1x128xf32> to vector<128x128xf32>
    %5 = arith.addf %2, %4 : vector<128x128xf32>
    %cst_5 = arith.constant 0.000000e+00 : f32
    %6 = vector.broadcast %cst_5 : f32 to vector<128x128xf32>
    %7 = arith.maximumf %5, %6 : vector<128x128xf32>
    %c0_6 = arith.constant 0 : index
    %c0_7 = arith.constant 0 : index
    %8 = vector.load %arg6[%c0_6, %c0_7] : memref<128x128xf32, #tpu.memory_space<vmem>>, vector<128x128xf32>
    %cst_8 = arith.constant dense<0.000000e+00> : vector<128x128xf32>
    %9 = tpu.matmul %7, %8, %cst_8 {dimension_numbers = #tpu.dot_dimension_numbers<[1], [0], [0], [1], [0, 0, 1, 1], [], []>} : vector<128x128xf32>, vector<128x128xf32>, vector<128x128xf32> -> vector<128x128xf32>
    %c0_9 = arith.constant 0 : index
    %c0_10 = arith.constant 0 : index
    %10 = vector.load %arg7[%c0_9, %c0_10] : memref<1x128xf32, #tpu.memory_space<vmem>>, vector<1x128xf32>
    %11 = vector.broadcast %10 : vector<1x128xf32> to vector<128x128xf32>
    %12 = arith.addf %9, %11 : vector<128x128xf32>
    %c0_11 = arith.constant 0 : index
    %c0_12 = arith.constant 0 : index
    %13 = vector.load %arg8[%c0_11, %c0_12] : memref<128x128xf32, #tpu.memory_space<vmem>>, vector<128x128xf32>
    tpu.vector_store %arg8[%c0_11, %c0_12], %12 {strides = array<i32>} : memref<128x128xf32, #tpu.memory_space<vmem>>, vector<128x128xf32>,
    return
  }
  func.func @transform_0(%arg0: i32, %arg1: i32, %arg2: i32) -> (i32, i32) {
    %c0_i32 = arith.constant 0 : i32
    %c0_i32_0 = arith.constant 0 : i32
    return %arg0, %c0_i32 : i32, i32
  }
  func.func @transform_1(%arg0: i32, %arg1: i32, %arg2: i32) -> (i32, i32) {
    %c0_i32 = arith.constant 0 : i32
    %c0_i32_0 = arith.constant 0 : i32
    return %c0_i32, %arg2 : i32, i32
  }
  func.func @transform_2(%arg0: i32, %arg1: i32, %arg2: i32) -> (i32, i32) {
    %c0_i32 = arith.constant 0 : i32
    %c0_i32_0 = arith.constant 0 : i32
    return %c0_i32, %arg2 : i32, i32
  }
  func.func @transform_3(%arg0: i32, %arg1: i32, %arg2: i32) -> (i32, i32) {
    %c0_i32 = arith.constant 0 : i32
    return %arg2, %arg1 : i32, i32
  }
  func.func @transform_4(%arg0: i32, %arg1: i32, %arg2: i32) -> (i32, i32) {
    %c0_i32 = arith.constant 0 : i32
    %c0_i32_0 = arith.constant 0 : i32
    return %c0_i32, %arg1 : i32, i32
  }
  func.func @transform_5(%arg0: i32, %arg1: i32, %arg2: i32) -> (i32, i32) {
    %c0_i32 = arith.constant 0 : i32
    return %arg0, %arg1 : i32, i32
  }
}

</mosaic_0001>

<llo_original>
// kernel: ffn_forward.1
$region0: #{ffn_forward.1}
  #allocation0 [shape = 'u32[]', space=smem, size = 0x4, offset = 0x4, fixed_abs, tag = 'smem constant byte address 0x4 - core index']
  #allocation1 [shape = 'u32[144,128]{1,0:T(1,128)}', space=vmem, size = 0x12000, scoped, tag = 'internal scratch']
  %s0 = inlined_call_operand.vmem [shape: f32[128,128], index: 0, kind: input, shape index: {}]
  %s1 = inlined_call_operand.vmem [shape: f32[128,128], index: 1, kind: input, shape index: {}]
  %s2 = inlined_call_operand.vmem [shape: f32[1,128], index: 2, kind: input, shape index: {}]
  %s3 = inlined_call_operand.hbm [shape: f32[128,128], index: 3, kind: input, shape index: {}]
  %s4 = inlined_call_operand.vmem [shape: f32[1,128], index: 4, kind: input, shape index: {}]
  %s5 = inlined_call_operand.vmem [shape: f32[128,128], index: 5, kind: output, shape index: {}]
  %s6 = sld [smem:[#allocation0]]
  $region34: #{ffn_forward.1} parent=0
    _
  %s8 = ssub.s32 1, %s6
  %s9 = scalar_select 0, %s8, %s6
  $region1: #{ffn_forward.1} parent=0
    #allocation2 [shape = 'u8[65536]{0}', space=vmem, size = 0x10000, scoped, tag = 'input window, operand 3, single buffered']
    #allocation3 [shape = 's32[1]{0}', space=sflag, size = 0x4, scoped, tag = 'scoped memory for ffn_forward.1']
    %10 = vsyncpa [#allocation3], 0
    // Predicated region
    $region2: #{ffn_forward.1} parent=1 // pred_check
      _
    $region3: #{ffn_forward.1} parent=1 // pred_check_branch
      %12 = sbr.rel (0) target = $region5
    $region4: #{ffn_forward.1} parent=1 // pred_region
      _
    $region5: #{ffn_forward.1} parent=1 // pred_fallthru
      _
    // Predicated region
    $region6: #{ffn_forward.1} parent=1 // pred_check
      _
    $region7: #{ffn_forward.1} parent=1 // pred_check_branch
      %14 = sbr.rel (0) target = $region9
    $region8: #{ffn_forward.1} parent=1 // pred_region
      _
    $region9: #{ffn_forward.1} parent=1 // pred_fallthru
      _
    // Predicated region
    $region10: #{ffn_forward.1} parent=1 // pred_check
      _
    $region11: #{ffn_forward.1} parent=1 // pred_check_branch
      %16 = sbr.rel (0) target = $region13
    $region12: #{ffn_forward.1} parent=1 // pred_region
      _
    $region13: #{ffn_forward.1} parent=1 // pred_fallthru
      _
    // Predicated region
    $region14: #{ffn_forward.1} parent=1 // pred_check
      _
    $region15: #{ffn_forward.1} parent=1 // pred_check_branch
      %18 = sbr.rel (0) target = $region17
    $region16: #{ffn_forward.1} parent=1 // pred_region
      %s20 = ssub.s32 2048, 2048
      %21 = vsyncadd [#allocation3], %s20
      %s22 = sshll.u32 [#allocation2], 4
      %s23 = int_to_ptr.vmem [resolvable:$true] %s22
      %28 = dma.hbm_to_vmem [thread:$0]  %s3, 2048, %s23, [#allocation3], 128, 128, 8
    $region17: #{ffn_forward.1} parent=1 // pred_fallthru
      _
    // Predicated region
    $region18: #{ffn_forward.1} parent=1 // pred_check
      _
    $region19: #{ffn_forward.1} parent=1 // pred_check_branch
      %30 = sbr.rel (0) target = $region21
    $region20: #{ffn_forward.1} parent=1 // pred_region
      _
    $region21: #{ffn_forward.1} parent=1 // pred_fallthru
      _
    // Predicated region
    $region22: #{ffn_forward.1} parent=1 // pred_check
      _
    $region23: #{ffn_forward.1} parent=1 // pred_check_branch
      %32 = sbr.rel (0) target = $region25
    $region24: #{ffn_forward.1} parent=1 // pred_region
      %33 = dma.done [#allocation3], 2048
    $region25: #{ffn_forward.1} parent=1 // pred_fallthru
      _
    %v34 = vld [vmem:[%s0] sm:$0xff]
    %v35 = vld [vmem:[%s0 + $0x8] sm:$0xff]
    %v36 = vld [vmem:[%s0 + $0x10] sm:$0xff]
    %v37 = vld [vmem:[%s0 + $0x18] sm:$0xff]
    %v38 = vld [vmem:[%s0 + $0x20] sm:$0xff]
    %v39 = vld [vmem:[%s0 + $0x28] sm:$0xff]
    %v40 = vld [vmem:[%s0 + $0x30] sm:$0xff]
    %v41 = vld [vmem:[%s0 + $0x38] sm:$0xff]
    %v42 = vld [vmem:[%s0 + $0x40] sm:$0xff]
    %v43 = vld [vmem:[%s0 + $0x48] sm:$0xff]
    %v44 = vld [vmem:[%s0 + $0x50] sm:$0xff]
    %v45 = vld [vmem:[%s0 + $0x58] sm:$0xff]
    %v46 = vld [vmem:[%s0 + $0x60] sm:$0xff]
    %v47 = vld [vmem:[%s0 + $0x68] sm:$0xff]
    %v48 = vld [vmem:[%s0 + $0x70] sm:$0xff]
    %v49 = vld [vmem:[%s0 + $0x78] sm:$0xff]
    %v50 = vld [vmem:[%s1] sm:$0xff]
    %v51 = vld [vmem:[%s1 + $0x8] sm:$0xff]
    %v52 = vld [vmem:[%s1 + $0x10] sm:$0xff]
    %v53 = vld [vmem:[%s1 + $0x18] sm:$0xff]
    %v54 = vld [vmem:[%s1 + $0x20] sm:$0xff]
    %v55 = vld [vmem:[%s1 + $0x28] sm:$0xff]
    %v56 = vld [vmem:[%s1 + $0x30] sm:$0xff]
    %v57 = vld [vmem:[%s1 + $0x38] sm:$0xff]
    %v58 = vld [vmem:[%s1 + $0x40] sm:$0xff]
    %v59 = vld [vmem:[%s1 + $0x48] sm:$0xff]
    %v60 = vld [vmem:[%s1 + $0x50] sm:$0xff]
    %v61 = vld [vmem:[%s1 + $0x58] sm:$0xff]
    %v62 = vld [vmem:[%s1 + $0x60] sm:$0xff]
    %v63 = vld [vmem:[%s1 + $0x68] sm:$0xff]
    %v64 = vld [vmem:[%s1 + $0x70] sm:$0xff]
    %v65 = vld [vmem:[%s1 + $0x78] sm:$0xff]
    %v66 = vld [vmem:[%s2] sm:$0x1]
    %v68 = vlaneseq
    %v69 = vshrl.u32 %v68, 7
    %v70 = vsub.s32 0, %v69
    %v71 = vrot.slane %v66, %v70
    %73 = vmatprep.subr.mxu0 0.0
    %74 = vmatpush1.msra.mxu0 %v50
    %75 = vmatprep.subr.mxu0 0.0
    %76 = vmatpush1.msra.mxu0 %v51
    %77 = vmatprep.subr.mxu0 0.0
    %78 = vmatpush1.msra.mxu0 %v52
    %79 = vmatprep.subr.mxu0 0.0
    %80 = vmatpush1.msra.mxu0 %v53
    %81 = vmatprep.subr.mxu0 0.0
    %82 = vmatpush1.msra.mxu0 %v54
    %83 = vmatprep.subr.mxu0 0.0
    %84 = vmatpush1.msra.mxu0 %v55
    %85 = vmatprep.subr.mxu0 0.0
    %86 = vmatpush1.msra.mxu0 %v56
    %87 = vmatprep.subr.mxu0 0.0
    %88 = vmatpush1.msra.mxu0 %v57
    %89 = vmatprep.subr.mxu0 0.0
    %90 = vmatpush1.msra.mxu0 %v58
    %91 = vmatprep.subr.mxu0 0.0
    %92 = vmatpush1.msra.mxu0 %v59
    %93 = vmatprep.subr.mxu0 0.0
    %94 = vmatpush1.msra.mxu0 %v60
    %95 = vmatprep.subr.mxu0 0.0
    %96 = vmatpush1.msra.mxu0 %v61
    %97 = vmatprep.subr.mxu0 0.0
    %98 = vmatpush1.msra.mxu0 %v62
    %99 = vmatprep.subr.mxu0 0.0
    %100 = vmatpush1.msra.mxu0 %v63
    %101 = vmatprep.subr.mxu0 0.0
    %102 = vmatpush1.msra.mxu0 %v64
    %103 = vmatprep.subr.mxu0 0.0
    %104 = vmatpush1.msra.mxu0 %v65
    %105 = vmatprep.subr.mxu0 0.0
    %106 = vmatpush1.msra.mxu0 0.0
    %107 = vmatprep.subr.mxu0 0.0
    %108 = vmatpush1.msra.mxu0 0.0
    %109 = vmatprep.subr.mxu0 0.0
    %110 = vmatpush1.msra.mxu0 0.0
    %111 = vmatprep.subr.mxu0 0.0
    %112 = vmatpush1.msra.mxu0 0.0
    %113 = vmatprep.subr.mxu0 0.0
    %114 = vmatpush1.msra.mxu0 0.0
    %115 = vmatprep.subr.mxu0 0.0
    %116 = vmatpush1.msra.mxu0 0.0
    %117 = vmatprep.subr.mxu0 0.0
    %118 = vmatpush1.msra.mxu0 0.0
    %119 = vmatprep.subr.mxu0 0.0
    %120 = vmatpush1.msra.mxu0 0.0
    %121 = vmatprep.subr.mxu0 0.0
    %122 = vmatpush1.msra.mxu0 0.0
    %123 = vmatprep.subr.mxu0 0.0
    %124 = vmatpush1.msra.mxu0 0.0
    %125 = vmatprep.subr.mxu0 0.0
    %126 = vmatpush1.msra.mxu0 0.0
    %127 = vmatprep.subr.mxu0 0.0
    %128 = vmatpush1.msra.mxu0 0.0
    %129 = vmatprep.subr.mxu0 0.0
    %130 = vmatpush1.msra.mxu0 0.0
    %131 = vmatprep.subr.mxu0 0.0
    %132 = vmatpush1.msra.mxu0 0.0
    %133 = vmatprep.subr.mxu0 0.0
    %134 = vmatpush1.msra.mxu0 0.0
    %135 = vmatprep.subr.mxu0 0.0
    %136 = vmatpush1.msra.mxu0 0.0
    %137 = vmatprep.mubr.f32.mxu0 0.0
    %138 = vmatmul.mubr.f32.gmra.mrb[0].mxu0 %v34
    %v139 = vpop.f32.mrb[0].mxu0
    %v140 = vadd.f32 %v71, %v139
    %v141 = vpop.f32.mrb[0].mxu0
    %142 = vmatprep.mubr.f32.mxu0 0.0
    %143 = vmatmul.mubr.f32.gmra.mrb[0].mxu0 %v35
    %v144 = vpop.f32.mrb[0].mxu0
    %v145 = vadd.f32 %v71, %v144
    %v146 = vpop.f32.mrb[0].mxu0
    %147 = vmatprep.mubr.f32.mxu0 0.0
    %148 = vmatmul.mubr.f32.gmra.mrb[0].mxu0 %v36
    %v149 = vpop.f32.mrb[0].mxu0
    %v150 = vadd.f32 %v71, %v149
    %v151 = vpop.f32.mrb[0].mxu0
    %152 = vmatprep.mubr.f32.mxu0 0.0
    %153 = vmatmul.mubr.f32.gmra.mrb[0].mxu0 %v37
    %v154 = vpop.f32.mrb[0].mxu0
    %v155 = vadd.f32 %v71, %v154
    %v156 = vpop.f32.mrb[0].mxu0
    %157 = vmatprep.mubr.f32.mxu0 0.0
    %158 = vmatmul.mubr.f32.gmra.mrb[0].mxu0 %v38
    %v159 = vpop.f32.mrb[0].mxu0
    %v160 = vadd.f32 %v71, %v159
    %v161 = vpop.f32.mrb[0].mxu0
    %162 = vmatprep.mubr.f32.mxu0 0.0
    %163 = vmatmul.mubr.f32.gmra.mrb[0].mxu0 %v39
    %v164 = vpop.f32.mrb[0].mxu0
    %v165 = vadd.f32 %v71, %v164
    %v166 = vpop.f32.mrb[0].mxu0
    %167 = vmatprep.mubr.f32.mxu0 0.0
    %168 = vmatmul.mubr.f32.gmra.mrb[0].mxu0 %v40
    %v169 = vpop.f32.mrb[0].mxu0
    %v170 = vadd.f32 %v71, %v169
    %v171 = vpop.f32.mrb[0].mxu0
    %172 = vmatprep.mubr.f32.mxu0 0.0
    %173 = vmatmul.mubr.f32.gmra.mrb[0].mxu0 %v41
    %v174 = vpop.f32.mrb[0].mxu0
    %v175 = vadd.f32 %v71, %v174
    %v176 = vpop.f32.mrb[0].mxu0
    %177 = vmatprep.mubr.f32.mxu0 0.0
    %178 = vmatmul.mubr.f32.gmra.mrb[0].mxu0 %v42
    %v179 = vpop.f32.mrb[0].mxu0
    %v180 = vadd.f32 %v71, %v179
    %v181 = vpop.f32.mrb[0].mxu0
    %182 = vmatprep.mubr.f32.mxu0 0.0
    %183 = vmatmul.mubr.f32.gmra.mrb[0].mxu0 %v43
    %v184 = vpop.f32.mrb[0].mxu0
    %v185 = vadd.f32 %v71, %v184
    %v186 = vpop.f32.mrb[0].mxu0
    %187 = vmatprep.mubr.f32.mxu0 0.0
    %188 = vmatmul.mubr.f32.gmra.mrb[0].mxu0 %v44
    %v189 = vpop.f32.mrb[0].mxu0
    %v190 = vadd.f32 %v71, %v189
    %v191 = vpop.f32.mrb[0].mxu0
    %192 = vmatprep.mubr.f32.mxu0 0.0
    %193 = vmatmul.mubr.f32.gmra.mrb[0].mxu0 %v45
    %v194 = vpop.f32.mrb[0].mxu0
    %v195 = vadd.f32 %v71, %v194
    %v196 = vpop.f32.mrb[0].mxu0
    %197 = vmatprep.mubr.f32.mxu0 0.0
    %198 = vmatmul.mubr.f32.gmra.mrb[0].mxu0 %v46
    %v199 = vpop.f32.mrb[0].mxu0
    %v200 = vadd.f32 %v71, %v199
    %v201 = vpop.f32.mrb[0].mxu0
    %202 = vmatprep.mubr.f32.mxu0 0.0
    %203 = vmatmul.mubr.f32.gmra.mrb[0].mxu0 %v47
    %v204 = vpop.f32.mrb[0].mxu0
    %v205 = vadd.f32 %v71, %v204
    %v206 = vpop.f32.mrb[0].mxu0
    %207 = vmatprep.mubr.f32.mxu0 0.0
    %208 = vmatmul.mubr.f32.gmra.mrb[0].mxu0 %v48
    %v209 = vpop.f32.mrb[0].mxu0
    %v210 = vadd.f32 %v71, %v209
    %v211 = vpop.f32.mrb[0].mxu0
    %212 = vmatprep.mubr.f32.mxu0 0.0
    %213 = vmatmul.mubr.f32.gmra.mrb[0].mxu0 %v49
    %v214 = vpop.f32.mrb[0].mxu0
    %v215 = vadd.f32 %v71, %v214
    %v216 = vpop.f32.mrb[0].mxu0
    %217 = vdwg.mxu0
    %v218 = vmax.f32 %v140, 0.0
    %v219 = vmax.f32 %v145, 0.0
    %v220 = vmax.f32 %v150, 0.0
    %v221 = vmax.f32 %v155, 0.0
    %v222 = vmax.f32 %v160, 0.0
    %v223 = vmax.f32 %v165, 0.0
    %v224 = vmax.f32 %v170, 0.0
    %v225 = vmax.f32 %v175, 0.0
    %v226 = vmax.f32 %v180, 0.0
    %v227 = vmax.f32 %v185, 0.0
    %v228 = vmax.f32 %v190, 0.0
    %v229 = vmax.f32 %v195, 0.0
    %v230 = vmax.f32 %v200, 0.0
    %v231 = vmax.f32 %v205, 0.0
    %v232 = vmax.f32 %v210, 0.0
    %v233 = vmax.f32 %v215, 0.0
    %v234 = vld [vmem:[#allocation2] sm:$0xff]
    %v235 = vld [vmem:[#allocation2 + $0x8] sm:$0xff]
    %v236 = vld [vmem:[#allocation2 + $0x10] sm:$0xff]
    %v237 = vld [vmem:[#allocation2 + $0x18] sm:$0xff]
    %v238 = vld [vmem:[#allocation2 + $0x20] sm:$0xff]
    %v239 = vld [vmem:[#allocation2 + $0x28] sm:$0xff]
    %v240 = vld [vmem:[#allocation2 + $0x30] sm:$0xff]
    %v241 = vld [vmem:[#allocation2 + $0x38] sm:$0xff]
    %v242 = vld [vmem:[#allocation2 + $0x40] sm:$0xff]
    %v243 = vld [vmem:[#allocation2 + $0x48] sm:$0xff]
    %v244 = vld [vmem:[#allocation2 + $0x50] sm:$0xff]
    %v245 = vld [vmem:[#allocation2 + $0x58] sm:$0xff]
    %v246 = vld [vmem:[#allocation2 + $0x60] sm:$0xff]
    %v247 = vld [vmem:[#allocation2 + $0x68] sm:$0xff]
    %v248 = vld [vmem:[#allocation2 + $0x70] sm:$0xff]
    %v249 = vld [vmem:[#allocation2 + $0x78] sm:$0xff]
    %v250 = vld [vmem:[%s4] sm:$0x1]
    %v252 = vlaneseq
    %v253 = vshrl.u32 %v252, 7
    %v254 = vsub.s32 0, %v253
    %v255 = vrot.slane %v250, %v254
    %257 = vmatprep.subr.mxu0 0.0
    %258 = vmatpush1.msra.mxu0 %v234
    %259 = vmatprep.subr.mxu0 0.0
    %260 = vmatpush1.msra.mxu0 %v235
    %261 = vmatprep.subr.mxu0 0.0
    %262 = vmatpush1.msra.mxu0 %v236
    %263 = vmatprep.subr.mxu0 0.0
    %264 = vmatpush1.msra.mxu0 %v237
    %265 = vmatprep.subr.mxu0 0.0
    %266 = vmatpush1.msra.mxu0 %v238
    %267 = vmatprep.subr.mxu0 0.0
    %268 = vmatpush1.msra.mxu0 %v239
    %269 = vmatprep.subr.mxu0 0.0
    %270 = vmatpush1.msra.mxu0 %v240
    %271 = vmatprep.subr.mxu0 0.0
    %272 = vmatpush1.msra.mxu0 %v241
    %273 = vmatprep.subr.mxu0 0.0
    %274 = vmatpush1.msra.mxu0 %v242
    %275 = vmatprep.subr.mxu0 0.0
    %276 = vmatpush1.msra.mxu0 %v243
    %277 = vmatprep.subr.mxu0 0.0
    %278 = vmatpush1.msra.mxu0 %v244
    %279 = vmatprep.subr.mxu0 0.0
    %280 = vmatpush1.msra.mxu0 %v245
    %281 = vmatprep.subr.mxu0 0.0
    %282 = vmatpush1.msra.mxu0 %v246
    %283 = vmatprep.subr.mxu0 0.0
    %284 = vmatpush1.msra.mxu0 %v247
    %285 = vmatprep.subr.mxu0 0.0
    %286 = vmatpush1.msra.mxu0 %v248
    %287 = vmatprep.subr.mxu0 0.0
    %288 = vmatpush1.msra.mxu0 %v249
    %289 = vmatprep.subr.mxu0 0.0
    %290 = vmatpush1.msra.mxu0 0.0
    %291 = vmatprep.subr.mxu0 0.0
    %292 = vmatpush1.msra.mxu0 0.0
    %293 = vmatprep.subr.mxu0 0.0
    %294 = vmatpush1.msra.mxu0 0.0
    %295 = vmatprep.subr.mxu0 0.0
    %296 = vmatpush1.msra.mxu0 0.0
    %297 = vmatprep.subr.mxu0 0.0
    %298 = vmatpush1.msra.mxu0 0.0
    %299 = vmatprep.subr.mxu0 0.0
    %300 = vmatpush1.msra.mxu0 0.0
    %301 = vmatprep.subr.mxu0 0.0
    %302 = vmatpush1.msra.mxu0 0.0
    %303 = vmatprep.subr.mxu0 0.0
    %304 = vmatpush1.msra.mxu0 0.0
    %305 = vmatprep.subr.mxu0 0.0
    %306 = vmatpush1.msra.mxu0 0.0
    %307 = vmatprep.subr.mxu0 0.0
    %308 = vmatpush1.msra.mxu0 0.0
    %309 = vmatprep.subr.mxu0 0.0
    %310 = vmatpush1.msra.mxu0 0.0
    %311 = vmatprep.subr.mxu0 0.0
    %312 = vmatpush1.msra.mxu0 0.0
    %313 = vmatprep.subr.mxu0 0.0
    %314 = vmatpush1.msra.mxu0 0.0
    %315 = vmatprep.subr.mxu0 0.0
    %316 = vmatpush1.msra.mxu0 0.0
    %317 = vmatprep.subr.mxu0 0.0
    %318 = vmatpush1.msra.mxu0 0.0
    %319 = vmatprep.subr.mxu0 0.0
    %320 = vmatpush1.msra.mxu0 0.0
    %321 = vmatprep.mubr.f32.mxu0 0.0
    %322 = vmatmul.mubr.f32.gmra.mrb[0].mxu0 %v218
    %v323 = vpop.f32.mrb[0].mxu0
    %v324 = vadd.f32 %v255, %v323
    %v325 = vpop.f32.mrb[0].mxu0
    %326 = vmatprep.mubr.f32.mxu0 0.0
    %327 = vmatmul.mubr.f32.gmra.mrb[0].mxu0 %v219
    %v328 = vpop.f32.mrb[0].mxu0
    %v329 = vadd.f32 %v255, %v328
    %v330 = vpop.f32.mrb[0].mxu0
    %331 = vmatprep.mubr.f32.mxu0 0.0
    %332 = vmatmul.mubr.f32.gmra.mrb[0].mxu0 %v220
    %v333 = vpop.f32.mrb[0].mxu0
    %v334 = vadd.f32 %v255, %v333
    %v335 = vpop.f32.mrb[0].mxu0
    %336 = vmatprep.mubr.f32.mxu0 0.0
    %337 = vmatmul.mubr.f32.gmra.mrb[0].mxu0 %v221
    %v338 = vpop.f32.mrb[0].mxu0
    %v339 = vadd.f32 %v255, %v338
    %v340 = vpop.f32.mrb[0].mxu0
    %341 = vmatprep.mubr.f32.mxu0 0.0
    %342 = vmatmul.mubr.f32.gmra.mrb[0].mxu0 %v222
    %v343 = vpop.f32.mrb[0].mxu0
    %v344 = vadd.f32 %v255, %v343
    %v345 = vpop.f32.mrb[0].mxu0
    %346 = vmatprep.mubr.f32.mxu0 0.0
    %347 = vmatmul.mubr.f32.gmra.mrb[0].mxu0 %v223
    %v348 = vpop.f32.mrb[0].mxu0
    %v349 = vadd.f32 %v255, %v348
    %v350 = vpop.f32.mrb[0].mxu0
    %351 = vmatprep.mubr.f32.mxu0 0.0
    %352 = vmatmul.mubr.f32.gmra.mrb[0].mxu0 %v224
    %v353 = vpop.f32.mrb[0].mxu0
    %v354 = vadd.f32 %v255, %v353
    %v355 = vpop.f32.mrb[0].mxu0
    %356 = vmatprep.mubr.f32.mxu0 0.0
    %357 = vmatmul.mubr.f32.gmra.mrb[0].mxu0 %v225
    %v358 = vpop.f32.mrb[0].mxu0
    %v359 = vadd.f32 %v255, %v358
    %v360 = vpop.f32.mrb[0].mxu0
    %361 = vmatprep.mubr.f32.mxu0 0.0
    %362 = vmatmul.mubr.f32.gmra.mrb[0].mxu0 %v226
    %v363 = vpop.f32.mrb[0].mxu0
    %v364 = vadd.f32 %v255, %v363
    %v365 = vpop.f32.mrb[0].mxu0
    %366 = vmatprep.mubr.f32.mxu0 0.0
    %367 = vmatmul.mubr.f32.gmra.mrb[0].mxu0 %v227
    %v368 = vpop.f32.mrb[0].mxu0
    %v369 = vadd.f32 %v255, %v368
    %v370 = vpop.f32.mrb[0].mxu0
    %371 = vmatprep.mubr.f32.mxu0 0.0
    %372 = vmatmul.mubr.f32.gmra.mrb[0].mxu0 %v228
    %v373 = vpop.f32.mrb[0].mxu0
    %v374 = vadd.f32 %v255, %v373
    %v375 = vpop.f32.mrb[0].mxu0
    %376 = vmatprep.mubr.f32.mxu0 0.0
    %377 = vmatmul.mubr.f32.gmra.mrb[0].mxu0 %v229
    %v378 = vpop.f32.mrb[0].mxu0
    %v379 = vadd.f32 %v255, %v378
    %v380 = vpop.f32.mrb[0].mxu0
    %381 = vmatprep.mubr.f32.mxu0 0.0
    %382 = vmatmul.mubr.f32.gmra.mrb[0].mxu0 %v230
    %v383 = vpop.f32.mrb[0].mxu0
    %v384 = vadd.f32 %v255, %v383
    %v385 = vpop.f32.mrb[0].mxu0
    %386 = vmatprep.mubr.f32.mxu0 0.0
    %387 = vmatmul.mubr.f32.gmra.mrb[0].mxu0 %v231
    %v388 = vpop.f32.mrb[0].mxu0
    %v389 = vadd.f32 %v255, %v388
    %v390 = vpop.f32.mrb[0].mxu0
    %391 = vmatprep.mubr.f32.mxu0 0.0
    %392 = vmatmul.mubr.f32.gmra.mrb[0].mxu0 %v232
    %v393 = vpop.f32.mrb[0].mxu0
    %v394 = vadd.f32 %v255, %v393
    %v395 = vpop.f32.mrb[0].mxu0
    %396 = vmatprep.mubr.f32.mxu0 0.0
    %397 = vmatmul.mubr.f32.gmra.mrb[0].mxu0 %v233
    %v398 = vpop.f32.mrb[0].mxu0
    %v399 = vadd.f32 %v255, %v398
    %v400 = vpop.f32.mrb[0].mxu0
    %401 = vdwg.mxu0
    %402 = vst [vmem:[%s5] sm:$0xff] %v324
    %403 = vst [vmem:[%s5 + $0x8] sm:$0xff] %v329
    %404 = vst [vmem:[%s5 + $0x10] sm:$0xff] %v334
    %405 = vst [vmem:[%s5 + $0x18] sm:$0xff] %v339
    %406 = vst [vmem:[%s5 + $0x20] sm:$0xff] %v344
    %407 = vst [vmem:[%s5 + $0x28] sm:$0xff] %v349
    %408 = vst [vmem:[%s5 + $0x30] sm:$0xff] %v354
    %409 = vst [vmem:[%s5 + $0x38] sm:$0xff] %v359
    %410 = vst [vmem:[%s5 + $0x40] sm:$0xff] %v364
    %411 = vst [vmem:[%s5 + $0x48] sm:$0xff] %v369
    %412 = vst [vmem:[%s5 + $0x50] sm:$0xff] %v374
    %413 = vst [vmem:[%s5 + $0x58] sm:$0xff] %v379
    %414 = vst [vmem:[%s5 + $0x60] sm:$0xff] %v384
    %415 = vst [vmem:[%s5 + $0x68] sm:$0xff] %v389
    %416 = vst [vmem:[%s5 + $0x70] sm:$0xff] %v394
    %417 = vst [vmem:[%s5 + $0x78] sm:$0xff] %v399
    // Predicated region
    $region26: #{ffn_forward.1} parent=1 // pred_check
      _
    $region27: #{ffn_forward.1} parent=1 // pred_check_branch
      %419 = sbr.rel (0) target = $region29
    $region28: #{ffn_forward.1} parent=1 // pred_region
      _
    $region29: #{ffn_forward.1} parent=1 // pred_fallthru
      _
    // Predicated region
    $region30: #{ffn_forward.1} parent=1 // pred_check
      _
    $region31: #{ffn_forward.1} parent=1 // pred_check_branch
      %421 = sbr.rel (0) target = $region33
    $region32: #{ffn_forward.1} parent=1 // pred_region
      _
    $region33: #{ffn_forward.1} parent=1 // pred_fallthru
      _
    %422 = vsyncpa [#allocation3], 1

</llo_original>
